<compile_context>
chip_gen: v7x
topology: tpu7x:2x2x1
jax: 0.10.0
libtpu: 0.0.40
codegen_flags: <defaults>
</compile_context>

<pallas_src>
import functools

import jax
import jax.numpy as jnp
from jax.experimental import pallas as pl
from jax.experimental.pallas import tpu as pltpu


def _log_sigmoid(x):
    # Stable log(sigmoid(x)) = min(x, 0) - log1p(exp(-|x|)); one exp + one
    # log1p on the EUP, everything else on the VPU.
    return jnp.minimum(x, 0.0) - jnp.log1p(jnp.exp(-jnp.abs(x)))


def _neg_sampling_kernel(inp_ref, outv_ref, noise_ref, part_ref, *,
                         batch, tile_batch, apply_mask):
    # Native-dtype tiles land in VMEM; upcast to f32 after the load so HBM
    # traffic is the native byte count (bf16 inputs -> half the bytes).
    inp = inp_ref[...].astype(jnp.float32)        # (TB, D)
    outv = outv_ref[...].astype(jnp.float32)      # (TB, D)
    noise = noise_ref[...].astype(jnp.float32)    # (TB, N, D)

    # <output_b, input_b>                                   -> (TB, 1)
    pos_score = jnp.sum(outv * inp, axis=-1, keepdims=True)
    # <noise_bn, input_b>                                   -> (TB, N)
    # NOTE: if a bundle dump shows this lane reduce binding the XLU slot on
    # v6e/v7x (or D is small / non-128-aligned), switch to the MXU-ones
    # reduction: jnp.dot((noise * inp[:, None, :]).reshape(TB*N, D),
    #                    ones((D, 1)), preferred_element_type=f32).
    neg_score = jnp.sum(noise * inp[:, None, :], axis=-1)

    # Per-row loss term: log sigma(pos) + sum_n log sigma(-neg_n)   -> (TB, 1)
    row_loss = _log_sigmoid(pos_score) + jnp.sum(
        _log_sigmoid(-neg_score), axis=-1, keepdims=True)

    if apply_mask:
        # cdiv grid: the last tile may contain out-of-bounds (garbage) rows;
        # zero their contribution (log_sigmoid(0) = -ln2 would bias the mean).
        row0 = pl.program_id(0) * tile_batch
        rows = row0 + jax.lax.broadcasted_iota(jnp.int32, (tile_batch, 1), 0)
        row_loss = jnp.where(rows < batch, row_loss, 0.0)

    tile_total = jnp.sum(row_loss)
    # Lane-dense, unmasked 128-lane store of this tile's partial sum.
    part_ref[...] = jnp.broadcast_to(tile_total.astype(part_ref.dtype), (1, 128))


def _vmem_capacity_bytes():
    try:
        return int(pltpu.get_tpu_info().vmem_capacity_bytes)
    except Exception:
        return 64 * 2**20  # conservative (v7x per-core VMEM); valid everywhere


def _choose_batch_tile(batch, n_noise, dim, target_f32_tile_bytes):
    """Largest batch tile TB (multiple of 8, or the full batch) whose
    f32-equivalent per-tile footprint stays within the target budget."""
    per_row_f32 = max(1, (n_noise + 2) * dim * 4)
    rows = int(target_f32_tile_bytes // per_row_f32)
    if rows >= batch:
        return batch
    rows = max(8, (rows // 8) * 8)
    return min(rows, batch)


def negative_sampling_loss(input_vectors, output_vectors, noise_vectors,
                           *, tile_batch=None):
    """Pallas equivalent of NegativeSampling.forward. Returns a scalar."""
    B, D = input_vectors.shape
    Bn, N, Dn = noise_vectors.shape
    assert Bn == B and Dn == D

    # Generation-aware budgets: ~8 MiB f32-equivalent noise tiles on v7x
    # (64 MiB VMEM), ~16 MiB on v5e/v6e (128 MiB VMEM).
    vmem_cap = _vmem_capacity_bytes()
    target_f32_tile = int(min(16 * 2**20, max(4 * 2**20, vmem_cap // 8)))

    if tile_batch is None:
        tile_batch = _choose_batch_tile(B, N, D, target_f32_tile)
    else:
        tile_batch = B if tile_batch >= B else max(8, (int(tile_batch) // 8) * 8)
        tile_batch = min(tile_batch, B)
    num_tiles = pl.cdiv(B, tile_batch)  # non-divisible batch -> masked last tile

    def _isz(x):
        return jnp.dtype(x.dtype).itemsize

    native_tile_bytes = tile_batch * D * (
        N * _isz(noise_vectors) + _isz(input_vectors) + _isz(output_vectors))
    f32_tile_bytes = tile_batch * (N + 2) * D * 4
    # 2x for the double-buffered DMA streams + ~3x f32-equivalent for the
    # in-kernel upcast / product / score temporaries, plus slack; clamped to
    # 80% of this generation's physical VMEM (respects v7x's 64 MiB).
    vmem_needed = 2 * native_tile_bytes + 3 * f32_tile_bytes + 4 * 2**20
    vmem_limit_bytes = int(min(max(32 * 2**20, vmem_needed),
                               int(vmem_cap * 0.8)))

    cost = pl.CostEstimate(
        flops=2 * B * D * (N + 1),
        transcendentals=2 * B * (N + 1),
        bytes_accessed=int(input_vectors.nbytes + output_vectors.nbytes
                           + noise_vectors.nbytes + num_tiles * 128 * 4),
    )

    kernel = functools.partial(
        _neg_sampling_kernel,
        batch=B,
        tile_batch=tile_batch,
        apply_mask=(B % tile_batch != 0),
    )

    grid_spec = pltpu.PrefetchScalarGridSpec(
        num_scalar_prefetch=0,
        grid=(num_tiles,),
        in_specs=[
            pl.BlockSpec((tile_batch, D), lambda i: (i, 0)),
            pl.BlockSpec((tile_batch, D), lambda i: (i, 0)),
            # Noise keeps full (N, D) trailing extents so the (8,128) rule
            # holds for any N/D.  If a trace shows the DMA still exposed after
            # the larger tiles, add pipeline_mode=pl.Buffered(3) here only.
            pl.BlockSpec((tile_batch, N, D), lambda i: (i, 0, 0)),
        ],
        # One lane-dense 128-wide block per grid step -> independent writes,
        # so the grid axis can be "parallel" (megacore split on v7x).
        out_specs=pl.BlockSpec((1, 128), lambda i: (0, i)),
    )

    partials = pl.pallas_call(
        kernel,
        out_shape=jax.ShapeDtypeStruct((1, num_tiles * 128), jnp.float32),
        grid_spec=grid_spec,
        compiler_params=pltpu.CompilerParams(
            dimension_semantics=("parallel",),
            vmem_limit_bytes=vmem_limit_bytes,
        ),
        cost_estimate=cost,
    )(input_vectors, output_vectors, noise_vectors)

    # Tiny final reduce in the wrapper: sum per-tile partials, negate, mean.
    per_tile = partials.reshape(num_tiles, 128)[:, 0]
    return -(jnp.sum(per_tile) / B)


def _reference_loss(input_vectors, output_vectors, noise_vectors):
    # Pure-JAX mirror of the PyTorch forward, in f32, for validation.
    inp = input_vectors.astype(jnp.float32)
    outv = output_vectors.astype(jnp.float32)
    noise = noise_vectors.astype(jnp.float32)
    out_score = jnp.einsum("bd,bd->b", outv, inp)
    out_loss = jax.nn.log_sigmoid(out_score)
    noise_score = jnp.einsum("bnd,bd->bn", noise, inp)
    noise_loss = jnp.sum(jax.nn.log_sigmoid(-noise_score), axis=1)
    return -jnp.mean(out_loss + noise_loss)


if __name__ == "__main__":
    B, N, D = 64, 8, 32  # batch, num negative samples, embedding dim

    key = jax.random.PRNGKey(0)
    k1, k2, k3 = jax.random.split(key, 3)
    input_vectors = jax.random.normal(k1, (B, D), dtype=jnp.float32)
    output_vectors = jax.random.normal(k2, (B, D), dtype=jnp.float32)
    noise_vectors = jax.random.normal(k3, (B, N, D), dtype=jnp.float32)

    ref = _reference_loss(input_vectors, output_vectors, noise_vectors)

    # 1) Multi-tile pipelined grid (4 batch tiles of 16 rows), f32 streams.
    loss = negative_sampling_loss(input_vectors, output_vectors, noise_vectors,
                                  tile_batch=16)
    loss = jax.block_until_ready(loss)
    assert jnp.allclose(loss, ref, rtol=1e-5, atol=1e-5), (loss, ref)

    # 2) Auto-chosen (generation-aware) tile: single full-extent block here.
    loss_auto = negative_sampling_loss(input_vectors, output_vectors,
                                       noise_vectors)
    loss_auto = jax.block_until_ready(loss_auto)
    assert jnp.allclose(loss_auto, ref, rtol=1e-5, atol=1e-5), (loss_auto, ref)

    # 3) Non-divisible batch exercises the cdiv grid + masked last tile.
    B2 = 60
    ref2 = _reference_loss(input_vectors[:B2], output_vectors[:B2],
                           noise_vectors[:B2])
    loss2 = negative_sampling_loss(input_vectors[:B2], output_vectors[:B2],
                                   noise_vectors[:B2], tile_batch=16)
    loss2 = jax.block_until_ready(loss2)
    assert jnp.allclose(loss2, ref2, rtol=1e-5, atol=1e-5), (loss2, ref2)

    # 4) Native-dtype (bf16) streaming: the kernel upcasts after the VMEM load,
    #    so HBM traffic is halved; compare against an f32 reference computed on
    #    the same bf16-rounded values.
    inp_bf = input_vectors.astype(jnp.bfloat16)
    out_bf = output_vectors.astype(jnp.bfloat16)
    noise_bf = noise_vectors.astype(jnp.bfloat16)
    ref_bf = _reference_loss(inp_bf, out_bf, noise_bf)
    loss_bf = negative_sampling_loss(inp_bf, out_bf, noise_bf, tile_batch=16)
    loss_bf = jax.block_until_ready(loss_bf)
    assert jnp.allclose(loss_bf, ref_bf, rtol=1e-4, atol=1e-4), (loss_bf, ref_bf)

    print("KERNEL_OK")
</pallas_src>

<mosaic_0001>
module attributes {stable_mosaic.version = 11 : i64} {
  func.func @_neg_sampling_kernel(%arg0: i32, %arg1: memref<16x32xf32, #tpu.memory_space<vmem>>, %arg2: memref<16x32xf32, #tpu.memory_space<vmem>>, %arg3: memref<16x8x32xf32, #tpu.memory_space<vmem>>, %arg4: memref<1x128xf32, #tpu.memory_space<vmem>>) attributes {dimension_semantics = [#tpu.dimension_semantics<parallel>], iteration_bounds = array<i64: 4>, scalar_prefetch = 0 : i64, scratch_operands = 0 : i64, tpu.core_type = #tpu.core_type<tc>, window_params = [{transform_indices = @transform_0, window_bounds = array<i64: 16, 32>}, {transform_indices = @transform_1, window_bounds = array<i64: 16, 32>}, {transform_indices = @transform_2, window_bounds = array<i64: 16, 8, 32>}, {transform_indices = @transform_3, window_bounds = array<i64: 1, 128>}]} {
    %c0 = arith.constant 0 : index
    %c0_0 = arith.constant 0 : index
    %0 = vector.load %arg1[%c0, %c0_0] : memref<16x32xf32, #tpu.memory_space<vmem>>, vector<16x32xf32>
    %c0_1 = arith.constant 0 : index
    %c0_2 = arith.constant 0 : index
    %1 = vector.load %arg2[%c0_1, %c0_2] : memref<16x32xf32, #tpu.memory_space<vmem>>, vector<16x32xf32>
    %c0_3 = arith.constant 0 : index
    %c0_4 = arith.constant 0 : index
    %c0_5 = arith.constant 0 : index
    %2 = vector.load %arg3[%c0_3, %c0_4, %c0_5] : memref<16x8x32xf32, #tpu.memory_space<vmem>>, vector<16x8x32xf32>
    %3 = arith.mulf %1, %0 : vector<16x32xf32>
    %cst = arith.constant dense<0.000000e+00> : vector<16xf32>
    %4 = vector.multi_reduction <add>, %3, %cst [1] : vector<16x32xf32> to vector<16xf32>
    %5 = vector.shape_cast %4 : vector<16xf32> to vector<16x1xf32>
    %6 = vector.shape_cast %0 : vector<16x32xf32> to vector<16x1x32xf32>
    %7 = vector.broadcast %6 : vector<16x1x32xf32> to vector<16x8x32xf32>
    %8 = arith.mulf %2, %7 : vector<16x8x32xf32>
    %cst_6 = arith.constant dense<0.000000e+00> : vector<16x8xf32>
    %9 = vector.multi_reduction <add>, %8, %cst_6 [2] : vector<16x8x32xf32> to vector<16x8xf32>
    %cst_7 = arith.constant 0.000000e+00 : f32
    %10 = vector.broadcast %cst_7 : f32 to vector<16x1xf32>
    %11 = arith.minimumf %5, %10 : vector<16x1xf32>
    %12 = math.absf %5 : vector<16x1xf32>
    %cst_8 = arith.constant 0.000000e+00 : f32
    %13 = vector.broadcast %cst_8 : f32 to vector<16x1xf32>
    %14 = arith.subf %13, %12 : vector<16x1xf32>
    %15 = math.exp %14 : vector<16x1xf32>
    %16 = math.log1p %15 : vector<16x1xf32>
    %17 = arith.subf %11, %16 : vector<16x1xf32>
    %cst_9 = arith.constant 0.000000e+00 : f32
    %18 = vector.broadcast %cst_9 : f32 to vector<16x8xf32>
    %19 = arith.subf %18, %9 : vector<16x8xf32>
    %cst_10 = arith.constant 0.000000e+00 : f32
    %20 = vector.broadcast %cst_10 : f32 to vector<16x8xf32>
    %21 = arith.minimumf %19, %20 : vector<16x8xf32>
    %22 = math.absf %19 : vector<16x8xf32>
    %cst_11 = arith.constant 0.000000e+00 : f32
    %23 = vector.broadcast %cst_11 : f32 to vector<16x8xf32>
    %24 = arith.subf %23, %22 : vector<16x8xf32>
    %25 = math.exp %24 : vector<16x8xf32>
    %26 = math.log1p %25 : vector<16x8xf32>
    %27 = arith.subf %21, %26 : vector<16x8xf32>
    %cst_12 = arith.constant dense<0.000000e+00> : vector<16xf32>
    %28 = vector.multi_reduction <add>, %27, %cst_12 [1] : vector<16x8xf32> to vector<16xf32>
    %29 = vector.shape_cast %28 : vector<16xf32> to vector<16x1xf32>
    %30 = arith.addf %17, %29 : vector<16x1xf32>
    %31 = vector.shape_cast %30 : vector<16x1xf32> to vector<1x16x1xf32>
    %cst_13 = arith.constant dense<0.000000e+00> : vector<1xf32>
    %32 = vector.multi_reduction <add>, %31, %cst_13 [1, 2] : vector<1x16x1xf32> to vector<1xf32>
    %33 = vector.shape_cast %32 : vector<1xf32> to vector<1x1x1xf32>
    %34 = vector.extract %33[0, 0, 0] : f32 from vector<1x1x1xf32>
    %35 = vector.broadcast %34 : f32 to vector<1x128xf32>
    %c0_14 = arith.constant 0 : index
    %c0_15 = arith.constant 0 : index
    %36 = vector.load %arg4[%c0_14, %c0_15] : memref<1x128xf32, #tpu.memory_space<vmem>>, vector<1x128xf32>
    tpu.vector_store %arg4[%c0_14, %c0_15], %35 {strides = array<i32>} : memref<1x128xf32, #tpu.memory_space<vmem>>, vector<1x128xf32>,
    return
  }
  func.func @transform_0(%arg0: i32) -> (i32, i32) {
    %c0_i32 = arith.constant 0 : i32
    %c0_i32_0 = arith.constant 0 : i32
    return %arg0, %c0_i32 : i32, i32
  }
  func.func @transform_1(%arg0: i32) -> (i32, i32) {
    %c0_i32 = arith.constant 0 : i32
    %c0_i32_0 = arith.constant 0 : i32
    return %arg0, %c0_i32 : i32, i32
  }
  func.func @transform_2(%arg0: i32) -> (i32, i32, i32) {
    %c0_i32 = arith.constant 0 : i32
    %c0_i32_0 = arith.constant 0 : i32
    %c0_i32_1 = arith.constant 0 : i32
    return %arg0, %c0_i32, %c0_i32_0 : i32, i32, i32
  }
  func.func @transform_3(%arg0: i32) -> (i32, i32) {
    %c0_i32 = arith.constant 0 : i32
    %c0_i32_0 = arith.constant 0 : i32
    return %c0_i32, %arg0 : i32, i32
  }
}

</mosaic_0001>

<llo_original>
// kernel: tpu_custom_call.1
$region0: #{tpu_custom_call.1}
  #allocation0 [shape = 'u32[]', space=smem, size = 0x4, offset = 0x4, fixed_abs, tag = 'smem constant byte address 0x4 - core index']
  #allocation1 [shape = 'u32[144,128]{1,0:T(1,128)}', space=vmem, size = 0x12000, scoped, tag = 'internal scratch']
  %s0 = inlined_call_operand.vmem [shape: f32[64,32], index: 0, kind: input, shape index: {}]
  %s1 = inlined_call_operand.vmem [shape: f32[64,32], index: 1, kind: input, shape index: {}]
  %s2 = inlined_call_operand.vmem [shape: f32[64,8,32], index: 2, kind: input, shape index: {}]
  %s3 = inlined_call_operand.hbm [shape: f32[1,512], index: 3, kind: output, shape index: {}]
  %s4 = sld [smem:[#allocation0]]
  $region45: #{tpu_custom_call.1} parent=0
    _
  %s6 = ssub.s32 1, %s4
  %s7 = scalar_select 0, %s6, %s4
  $region1: #{tpu_custom_call.1} parent=0
    #allocation2 [shape = 'u8[1024]{0}', space=vmem, size = 0x400, scoped, tag = 'output window, operand 0']
    #allocation3 [shape = 's32[2]{0}', space=sflag, size = 0x8, scoped, tag = 'scoped memory for tpu_custom_call.1']
    %8 = vsyncpa [#allocation3], 0
    %s9 = scalar_lea.sflag [#allocation3], 1
    %10 = vsyncpa %s9, 0
    loop: start=0, step=1, limit=6
    $region2: #{tpu_custom_call.1} parent=1 // loop_pre_header
      _
    $region3: #{tpu_custom_call.1} parent=1 // loop_header
      %s12 = sphi 0, %s16
      %p13 = scmp.ge.s32.totalorder %s12, 6
      %s22 = sphi 0, %s24
      %s25 = sphi 0, %s22
      %s26 = sphi 0, %s25
      %s42 = sphi 0, %s26
      %s48 = sphi 0, %s50
      %s51 = sphi 0, %s48
      %s52 = sphi 0, %s51
      %s68 = sphi 0, %s52
      %s74 = sphi 0, %s76
      %s77 = sphi 0, %s74
      %s78 = sphi 0, %s77
      %s94 = sphi 0, %s78
      %s100 = sphi 0, %s102
      %s103 = sphi 0, %s100
      %s104 = sphi 0, %s103
      %s120 = sphi 0, %s104
    $region4: #{tpu_custom_call.1} parent=1 // loop_header_branch
      %15 = sbr.rel (%p13) target = $region8
    $region5: #{tpu_custom_call.1} parent=1 // loop_body
      %s17 = ssub.s32 %s12, 1
      %s18 = ssub.s32 %s12, 2
      %s19 = sadd.s32 %s12, 1
      %s20 = ssub.s32 %s12, %s19
      %p21 = scmp.eq.s32.totalorder %s20, 0
      %s23 = sadd.s32 %s22, 1
      %s24 = scalar_select %p21, %s22, %s23
      %p27 = pneg %p21
      %p28 = scmp.eq.s32.totalorder %s12, 3
      %p29 = por %p27, %p28
      %p30 = scmp.ne.s32.totalorder %s22, %s25
      %p31 = scmp.eq.s32.totalorder %s12, 0
      %p32 = por %p30, %p31
      %p33 = scmp.ne.s32.totalorder %s22, %s25
      %p34 = scmp.eq.s32.totalorder %s17, 3
      %p35 = por %p33, %p34
      %p36 = scmp.ne.s32.totalorder %s25, %s26
      %p37 = scmp.eq.s32.totalorder %s17, 0
      %p38 = por %p36, %p37
      %p39 = scmp.ne.s32.totalorder %s25, %s26
      %p40 = scmp.eq.s32.totalorder %s18, 3
      %p41 = por %p39, %p40
      %p43 = scmp.ne.s32.totalorder %s26, %s42
      %p44 = scmp.eq.s32.totalorder %s18, 0
      %p45 = por %p43, %p44
      %s46 = ssub.s32 %s12, %s19
      %p47 = scmp.eq.s32.totalorder %s46, 0
      %s49 = sadd.s32 %s48, 1
      %s50 = scalar_select %p47, %s48, %s49
      %p53 = pneg %p47
      %p54 = scmp.eq.s32.totalorder %s12, 3
      %p55 = por %p53, %p54
      %p56 = scmp.ne.s32.totalorder %s48, %s51
      %p57 = scmp.eq.s32.totalorder %s12, 0
      %p58 = por %p56, %p57
      %p59 = scmp.ne.s32.totalorder %s48, %s51
      %p60 = scmp.eq.s32.totalorder %s17, 3
      %p61 = por %p59, %p60
      %p62 = scmp.ne.s32.totalorder %s51, %s52
      %p63 = scmp.eq.s32.totalorder %s17, 0
      %p64 = por %p62, %p63
      %p65 = scmp.ne.s32.totalorder %s51, %s52
      %p66 = scmp.eq.s32.totalorder %s18, 3
      %p67 = por %p65, %p66
      %p69 = scmp.ne.s32.totalorder %s52, %s68
      %p70 = scmp.eq.s32.totalorder %s18, 0
      %p71 = por %p69, %p70
      %s72 = ssub.s32 %s12, %s19
      %p73 = scmp.eq.s32.totalorder %s72, 0
      %s75 = sadd.s32 %s74, 1
      %s76 = scalar_select %p73, %s74, %s75
      %p79 = pneg %p73
      %p80 = scmp.eq.s32.totalorder %s12, 3
      %p81 = por %p79, %p80
      %p82 = scmp.ne.s32.totalorder %s74, %s77
      %p83 = scmp.eq.s32.totalorder %s12, 0
      %p84 = por %p82, %p83
      %p85 = scmp.ne.s32.totalorder %s74, %s77
      %p86 = scmp.eq.s32.totalorder %s17, 3
      %p87 = por %p85, %p86
      %p88 = scmp.ne.s32.totalorder %s77, %s78
      %p89 = scmp.eq.s32.totalorder %s17, 0
      %p90 = por %p88, %p89
      %p91 = scmp.ne.s32.totalorder %s77, %s78
      %p92 = scmp.eq.s32.totalorder %s18, 3
      %p93 = por %p91, %p92
      %p95 = scmp.ne.s32.totalorder %s78, %s94
      %p96 = scmp.eq.s32.totalorder %s18, 0
      %p97 = por %p95, %p96
      %s98 = ssub.s32 %s12, %s19
      %p99 = scmp.eq.s32.totalorder %s98, 0
      %s101 = sadd.s32 %s100, 1
      %s102 = scalar_select %p99, %s100, %s101
      %p105 = pneg %p99
      %p106 = scmp.eq.s32.totalorder %s12, 3
      %p107 = por %p105, %p106
      %p108 = scmp.ne.s32.totalorder %s100, %s103
      %p109 = scmp.eq.s32.totalorder %s12, 0
      %p110 = por %p108, %p109
      %p111 = scmp.ne.s32.totalorder %s100, %s103
      %p112 = scmp.eq.s32.totalorder %s17, 3
      %p113 = por %p111, %p112
      %p114 = scmp.ne.s32.totalorder %s103, %s104
      %p115 = scmp.eq.s32.totalorder %s17, 0
      %p116 = por %p114, %p115
      %p117 = scmp.ne.s32.totalorder %s103, %s104
      %p118 = scmp.eq.s32.totalorder %s18, 3
      %p119 = por %p117, %p118
      %p121 = scmp.ne.s32.totalorder %s104, %s120
      %p122 = scmp.eq.s32.totalorder %s18, 0
      %p123 = por %p121, %p122
      %p124 = scmp.le.s32.totalorder 1, %s12
      %p125 = scmp.lt.s32.totalorder %s12, 5
      %p126 = pnand %p124, %p125
      %p127 = pneg %p126
      // Predicated region
      $region9: #{tpu_custom_call.1} parent=5 // pred_check
        _
      $region10: #{tpu_custom_call.1} parent=5 // pred_check_branch
        %129 = sbr.rel (%p126) target = $region12
      $region11: #{tpu_custom_call.1} parent=5 // pred_region
        %s130 = ssub.s32 %s12, 1
      $region12: #{tpu_custom_call.1} parent=5 // pred_fallthru
        _
      %p131 = scmp.lt.s32.totalorder %s12, 4
      // Predicated region
      $region13: #{tpu_custom_call.1} parent=5 // pred_check
        %p132 = pneg %p131
      $region14: #{tpu_custom_call.1} parent=5 // pred_check_branch
        %134 = sbr.rel (%p132) target = $region16
      $region15: #{tpu_custom_call.1} parent=5 // pred_region
        // Predicated region
        $region17: #{tpu_custom_call.1} parent=15 // pred_check
          %p135 = pneg %p32
        $region18: #{tpu_custom_call.1} parent=15 // pred_check_branch
          %137 = sbr.rel (%p135) target = $region20
        $region19: #{tpu_custom_call.1} parent=15 // pred_region
          %s138 = smul.u32 2, %s12
          %p139 = scmp.lt.s32.totalorder %s138, 7
          %s140 = scalar_select %p139, %s138, 7
          %s141 = smul.addr %s140, 8
          %s142 = scalar_lea.vmem %s0, %s141
          %s143 = smul.u32 2, %s12
        $region20: #{tpu_custom_call.1} parent=15 // pred_fallthru
          _
        // Predicated region
        $region21: #{tpu_custom_call.1} parent=15 // pred_check
          %p144 = pneg %p58
        $region22: #{tpu_custom_call.1} parent=15 // pred_check_branch
          %146 = sbr.rel (%p144) target = $region24
        $region23: #{tpu_custom_call.1} parent=15 // pred_region
          %s147 = smul.u32 2, %s12
          %p148 = scmp.lt.s32.totalorder %s147, 7
          %s149 = scalar_select %p148, %s147, 7
          %s150 = smul.addr %s149, 8
          %s151 = scalar_lea.vmem %s1, %s150
          %s152 = smul.u32 2, %s12
        $region24: #{tpu_custom_call.1} parent=15 // pred_fallthru
          _
        // Predicated region
        $region25: #{tpu_custom_call.1} parent=15 // pred_check
          %p153 = pneg %p84
        $region26: #{tpu_custom_call.1} parent=15 // pred_check_branch
          %155 = sbr.rel (%p153) target = $region28
        $region27: #{tpu_custom_call.1} parent=15 // pred_region
          %s156 = smul.u32 16, %s12
          %p157 = scmp.lt.s32.totalorder %s156, 63
          %s158 = scalar_select %p157, %s156, 63
          %s159 = smul.addr %s158, 8
          %s160 = scalar_lea.vmem %s2, %s159
          %s161 = smul.u32 16, %s12
        $region28: #{tpu_custom_call.1} parent=15 // pred_fallthru
          _
      $region16: #{tpu_custom_call.1} parent=5 // pred_fallthru
        _
      %p162 = scmp.le.s32.totalorder 1, %s12
      %p163 = scmp.lt.s32.totalorder %s12, 5
      %p164 = pnand %p162, %p163
      %p165 = pneg %p164
      // Predicated region
      $region29: #{tpu_custom_call.1} parent=5 // pred_check
        _
      $region30: #{tpu_custom_call.1} parent=5 // pred_check_branch
        %167 = sbr.rel (%p164) target = $region32
      $region31: #{tpu_custom_call.1} parent=5 // pred_region
        %s168 = ssub.s32 %s12, 1
        %s169 = smul.u32 2, %s17
        %p170 = scmp.lt.s32.totalorder %s169, 7
        %s171 = scalar_select %p170, %s169, 7
        %s172 = smul.addr %s171, 8
        %s173 = scalar_lea.vmem %s0, %s172
        %p174 = pneg %p38
        %p175 = pneg %p35
        %s176 = smul.u32 2, %s17
        %p177 = scmp.lt.s32.totalorder %s176, 7
        %s178 = scalar_select %p177, %s176, 7
        %s179 = smul.addr %s178, 8
        %s180 = scalar_lea.vmem %s1, %s179
        %p181 = pneg %p64
        %p182 = pneg %p61
        %s183 = smul.u32 16, %s17
        %p184 = scmp.lt.s32.totalorder %s183, 63
        %s185 = scalar_select %p184, %s183, 63
        %s186 = smul.addr %s185, 8
        %s187 = scalar_lea.vmem %s2, %s186
        %p188 = pneg %p90
        %p189 = pneg %p87
        %p190 = pneg %p116
        %p191 = pneg %p113
        %s192 = sand.u32 %s103, 1
        %s193 = scalar_lea.sflag [#allocation3], %s192
        %s194 = sand.u32 %s103, 1
        %s195 = scalar_lea.vmem [#allocation2], %s194
        %s196 = smul.u32 2, %s17
        %p197 = scmp.lt.s32.totalorder %s196, 7
        %s198 = scalar_select %p197, %s196, 7
        %s199 = smul.addr %s198, 8
        %s200 = scalar_lea.vmem %s0, %s199
        %s201 = smul.u32 2, %s17
        %s202 = smul.u32 2, %s17
        %p203 = scmp.lt.s32.totalorder %s202, 7
        %s204 = scalar_select %p203, %s202, 7
        %s205 = smul.addr %s204, 8
        %s206 = scalar_lea.vmem %s1, %s205
        %s207 = smul.u32 2, %s17
        %s208 = smul.u32 16, %s17
        %p209 = scmp.lt.s32.totalorder %s208, 63
        %s210 = scalar_select %p209, %s208, 63
        %s211 = smul.addr %s210, 8
        %s212 = scalar_lea.vmem %s2, %s211
        %s213 = smul.u32 16, %s17
        %v214 = vld [vmem:[%s200] sm:$0xff]
        %v215 = vld [vmem:[%s200 + $0x8] sm:$0xff]
        %v216 = vld [vmem:[%s206] sm:$0xff]
        %v217 = vld [vmem:[%s206 + $0x8] sm:$0xff]
        %v218 = vld [vmem:[%s212] sm:$0xff]
        %v219 = vld [vmem:[%s212 + $0x8] sm:$0xff]
        %v220 = vld [vmem:[%s212 + $0x10] sm:$0xff]
        %v221 = vld [vmem:[%s212 + $0x18] sm:$0xff]
        %v222 = vld [vmem:[%s212 + $0x20] sm:$0xff]
        %v223 = vld [vmem:[%s212 + $0x28] sm:$0xff]
        %v224 = vld [vmem:[%s212 + $0x30] sm:$0xff]
        %v225 = vld [vmem:[%s212 + $0x38] sm:$0xff]
        %v226 = vld [vmem:[%s212 + $0x40] sm:$0xff]
        %v227 = vld [vmem:[%s212 + $0x48] sm:$0xff]
        %v228 = vld [vmem:[%s212 + $0x50] sm:$0xff]
        %v229 = vld [vmem:[%s212 + $0x58] sm:$0xff]
        %v230 = vld [vmem:[%s212 + $0x60] sm:$0xff]
        %v231 = vld [vmem:[%s212 + $0x68] sm:$0xff]
        %v232 = vld [vmem:[%s212 + $0x70] sm:$0xff]
        %v233 = vld [vmem:[%s212 + $0x78] sm:$0xff]
        %v234 = vmul.f32 %v216, %v214
        %v235 = vmul.f32 %v217, %v215
        %vm236 = vcmask 261120
        %v237 = vsel %vm236, %v234, 0.0
        %238 = vadd.xlane.f32.xlu0 %v237
        %v239 = vpop.xlane.xlu0 %238
        %v240 = vsel %vm236, %v235, 0.0
        %241 = vadd.xlane.f32.xlu0 %v240
        %v242 = vpop.xlane.xlu0 %241
        %v245 = vcombine.high %v214, %v214
        %v247 = vunpack.c.l.s4 1966171168
        %v248 = vunpack.c.0.s8 %v247
        %v249 = vlaneseq
        %v250 = vshrl.u32 %v249, 7
        %v251 = vsub.s32 %v248, %v250
        %v252 = vrot.slane %v214, %v251
        %v254 = vunpack.c.l.s4 1966171168
        %v255 = vunpack.c.0.s8 %v254
        %v256 = vlaneseq
        %v257 = vshrl.u32 %v256, 7
        %v258 = vsub.s32 %v255, %v257
        %v259 = vrot.slane %v245, %v258
        %v260 = vcombine.high %v252, %v252
        %v261 = vcombine.high %v259, %v259
        %v263 = vunpack.c.l.s4 1966171168
        %v264 = vunpack.c.0.s8 %v263
        %v265 = vlaneseq
        %v266 = vshrl.u32 %v265, 7
        %v267 = vsub.s32 %v264, %v266
        %v268 = vrot.slane %v252, %v267
        %v270 = vunpack.c.l.s4 1966171168
        %v271 = vunpack.c.0.s8 %v270
        %v272 = vlaneseq
        %v273 = vshrl.u32 %v272, 7
        %v274 = vsub.s32 %v271, %v273
        %v275 = vrot.slane %v259, %v274
        %v277 = vunpack.c.l.s4 1966171168
        %v278 = vunpack.c.0.s8 %v277
        %v279 = vlaneseq
        %v280 = vshrl.u32 %v279, 7
        %v281 = vsub.s32 %v278, %v280
        %v282 = vrot.slane %v260, %v281
        %v284 = vunpack.c.l.s4 1966171168
        %v285 = vunpack.c.0.s8 %v284
        %v286 = vlaneseq
        %v287 = vshrl.u32 %v286, 7
        %v288 = vsub.s32 %v285, %v287
        %v289 = vrot.slane %v261, %v288
        %v290 = vcombine.high %v268, %v268
        %v291 = vcombine.high %v275, %v275
        %v292 = vcombine.high %v282, %v282
        %v293 = vcombine.high %v289, %v289
        %v294 = vcombine.high %v215, %v215
        %v296 = vunpack.c.l.s4 1966171168
        %v297 = vunpack.c.0.s8 %v296
        %v298 = vlaneseq
        %v299 = vshrl.u32 %v298, 7
        %v300 = vsub.s32 %v297, %v299
        %v301 = vrot.slane %v215, %v300
        %v303 = vunpack.c.l.s4 1966171168
        %v304 = vunpack.c.0.s8 %v303
        %v305 = vlaneseq
        %v306 = vshrl.u32 %v305, 7
        %v307 = vsub.s32 %v304, %v306
        %v308 = vrot.slane %v294, %v307
        %v309 = vcombine.high %v301, %v301
        %v310 = vcombine.high %v308, %v308
        %v312 = vunpack.c.l.s4 1966171168
        %v313 = vunpack.c.0.s8 %v312
        %v314 = vlaneseq
        %v315 = vshrl.u32 %v314, 7
        %v316 = vsub.s32 %v313, %v315
        %v317 = vrot.slane %v301, %v316
        %v319 = vunpack.c.l.s4 1966171168
        %v320 = vunpack.c.0.s8 %v319
        %v321 = vlaneseq
        %v322 = vshrl.u32 %v321, 7
        %v323 = vsub.s32 %v320, %v322
        %v324 = vrot.slane %v308, %v323
        %v326 = vunpack.c.l.s4 1966171168
        %v327 = vunpack.c.0.s8 %v326
        %v328 = vlaneseq
        %v329 = vshrl.u32 %v328, 7
        %v330 = vsub.s32 %v327, %v329
        %v331 = vrot.slane %v309, %v330
        %v333 = vunpack.c.l.s4 1966171168
        %v334 = vunpack.c.0.s8 %v333
        %v335 = vlaneseq
        %v336 = vshrl.u32 %v335, 7
        %v337 = vsub.s32 %v334, %v336
        %v338 = vrot.slane %v310, %v337
        %v339 = vcombine.high %v317, %v317
        %v340 = vcombine.high %v324, %v324
        %v341 = vcombine.high %v331, %v331
        %v342 = vcombine.high %v338, %v338
        %v343 = vlaneseq
        %v344 = vshrl.u32 %v343, 7
        %v345 = vsub.s32 0, %v344
        %v346 = vrot.slane %v268, %v345
        %v347 = vlaneseq
        %v348 = vshrl.u32 %v347, 7
        %v349 = vsub.s32 0, %v348
        %v350 = vrot.slane %v282, %v349
        %v351 = vlaneseq
        %v352 = vshrl.u32 %v351, 7
        %v353 = vsub.s32 0, %v352
        %v354 = vrot.slane %v290, %v353
        %v355 = vlaneseq
        %v356 = vshrl.u32 %v355, 7
        %v357 = vsub.s32 0, %v356
        %v358 = vrot.slane %v292, %v357
        %v359 = vlaneseq
        %v360 = vshrl.u32 %v359, 7
        %v361 = vsub.s32 0, %v360
        %v362 = vrot.slane %v275, %v361
        %v363 = vlaneseq
        %v364 = vshrl.u32 %v363, 7
        %v365 = vsub.s32 0, %v364
        %v366 = vrot.slane %v289, %v365
        %v367 = vlaneseq
        %v368 = vshrl.u32 %v367, 7
        %v369 = vsub.s32 0, %v368
        %v370 = vrot.slane %v291, %v369
        %v371 = vlaneseq
        %v372 = vshrl.u32 %v371, 7
        %v373 = vsub.s32 0, %v372
        %v374 = vrot.slane %v293, %v373
        %v375 = vlaneseq
        %v376 = vshrl.u32 %v375, 7
        %v377 = vsub.s32 0, %v376
        %v378 = vrot.slane %v317, %v377
        %v379 = vlaneseq
        %v380 = vshrl.u32 %v379, 7
        %v381 = vsub.s32 0, %v380
        %v382 = vrot.slane %v331, %v381
        %v383 = vlaneseq
        %v384 = vshrl.u32 %v383, 7
        %v385 = vsub.s32 0, %v384
        %v386 = vrot.slane %v339, %v385
        %v387 = vlaneseq
        %v388 = vshrl.u32 %v387, 7
        %v389 = vsub.s32 0, %v388
        %v390 = vrot.slane %v341, %v389
        %v391 = vlaneseq
        %v392 = vshrl.u32 %v391, 7
        %v393 = vsub.s32 0, %v392
        %v394 = vrot.slane %v324, %v393
        %v395 = vlaneseq
        %v396 = vshrl.u32 %v395, 7
        %v397 = vsub.s32 0, %v396
        %v398 = vrot.slane %v338, %v397
        %v399 = vlaneseq
        %v400 = vshrl.u32 %v399, 7
        %v401 = vsub.s32 0, %v400
        %v402 = vrot.slane %v340, %v401
        %v403 = vlaneseq
        %v404 = vshrl.u32 %v403, 7
        %v405 = vsub.s32 0, %v404
        %v406 = vrot.slane %v342, %v405
        %v423 = vmul.f32 %v218, %v346
        %v424 = vmul.f32 %v219, %v350
        %v425 = vmul.f32 %v220, %v354
        %v426 = vmul.f32 %v221, %v358
        %v427 = vmul.f32 %v222, %v362
        %v428 = vmul.f32 %v223, %v366
        %v429 = vmul.f32 %v224, %v370
        %v430 = vmul.f32 %v225, %v374
        %v431 = vmul.f32 %v226, %v378
        %v432 = vmul.f32 %v227, %v382
        %v433 = vmul.f32 %v228, %v386
        %v434 = vmul.f32 %v229, %v390
        %v435 = vmul.f32 %v230, %v394
        %v436 = vmul.f32 %v231, %v398
        %v437 = vmul.f32 %v232, %v402
        %v438 = vmul.f32 %v233, %v406
        %v439 = vsel %vm236, %v423, 0.0
        %440 = vadd.xlane.f32.xlu0 %v439
        %v441 = vpop.xlane.xlu0 %440
        %v442 = vsel %vm236, %v424, 0.0
        %443 = vadd.xlane.f32.xlu0 %v442
        %v444 = vpop.xlane.xlu0 %443
        %v445 = vsel %vm236, %v425, 0.0
        %446 = vadd.xlane.f32.xlu0 %v445
        %v447 = vpop.xlane.xlu0 %446
        %v448 = vsel %vm236, %v426, 0.0
        %449 = vadd.xlane.f32.xlu0 %v448
        %v450 = vpop.xlane.xlu0 %449
        %v451 = vsel %vm236, %v427, 0.0
        %452 = vadd.xlane.f32.xlu0 %v451
        %v453 = vpop.xlane.xlu0 %452
        %v454 = vsel %vm236, %v428, 0.0
        %455 = vadd.xlane.f32.xlu0 %v454
        %v456 = vpop.xlane.xlu0 %455
        %v457 = vsel %vm236, %v429, 0.0
        %458 = vadd.xlane.f32.xlu0 %v457
        %v459 = vpop.xlane.xlu0 %458
        %v460 = vsel %vm236, %v430, 0.0
        %461 = vadd.xlane.f32.xlu0 %v460
        %v462 = vpop.xlane.xlu0 %461
        %v463 = vsel %vm236, %v431, 0.0
        %464 = vadd.xlane.f32.xlu0 %v463
        %v465 = vpop.xlane.xlu0 %464
        %v466 = vsel %vm236, %v432, 0.0
        %467 = vadd.xlane.f32.xlu0 %v466
        %v468 = vpop.xlane.xlu0 %467
        %v469 = vsel %vm236, %v433, 0.0
        %470 = vadd.xlane.f32.xlu0 %v469
        %v471 = vpop.xlane.xlu0 %470
        %v472 = vsel %vm236, %v434, 0.0
        %473 = vadd.xlane.f32.xlu0 %v472
        %v474 = vpop.xlane.xlu0 %473
        %v475 = vsel %vm236, %v435, 0.0
        %476 = vadd.xlane.f32.xlu0 %v475
        %v477 = vpop.xlane.xlu0 %476
        %v478 = vsel %vm236, %v436, 0.0
        %479 = vadd.xlane.f32.xlu0 %v478
        %v480 = vpop.xlane.xlu0 %479
        %v481 = vsel %vm236, %v437, 0.0
        %482 = vadd.xlane.f32.xlu0 %v481
        %v483 = vpop.xlane.xlu0 %482
        %v484 = vsel %vm236, %v438, 0.0
        %485 = vadd.xlane.f32.xlu0 %v484
        %v486 = vpop.xlane.xlu0 %485
        %v487 = vmin.f32 %v239, 0.0
        %v488 = vmin.f32 %v242, 0.0
        %v489 = vand.u32 2147483647, %v239
        %v490 = vand.u32 2147483647, %v242
        %v491 = vsub.f32 0.0, %v489
        %v492 = vsub.f32 0.0, %v490
        %v493 = vmul.f32 %v491, 1.442695
        %v494 = vpow.pop %v493
        %v495 = vmul.f32 %v492, 1.442695
        %v496 = vpow.pop %v495
        %v497 = vadd.f32 %v494, 1.0
        %v498 = vlog2.pop %v497
        %v499 = vmul.f32 %v498, 0.6931472
        %v500 = vmul.f32 -0.5, %v494
        %v501 = vadd.f32 %v500, 1.0
        %v502 = vmul.f32 %v501, %v494
        %v503 = vand.u32 2147483647, %v494
        %vm504 = vcmp.lt.f32.partialorder %v503, 0.0004427343
        %v505 = vsel %vm504, %v502, %v499
        %v506 = vadd.f32 %v496, 1.0
        %v507 = vlog2.pop %v506
        %v508 = vmul.f32 %v507, 0.6931472
        %v509 = vmul.f32 -0.5, %v496
        %v510 = vadd.f32 %v509, 1.0
        %v511 = vmul.f32 %v510, %v496
        %v512 = vand.u32 2147483647, %v496
        %vm513 = vcmp.lt.f32.partialorder %v512, 0.0004427343
        %v514 = vsel %vm513, %v511, %v508
        %v515 = vsub.f32 %v487, %v505
        %v516 = vsub.f32 %v488, %v514
        %v517 = vsub.f32 0.0, %v441
        %v518 = vsub.f32 0.0, %v444
        %v519 = vsub.f32 0.0, %v447
        %v520 = vsub.f32 0.0, %v450
        %v521 = vsub.f32 0.0, %v453
        %v522 = vsub.f32 0.0, %v456
        %v523 = vsub.f32 0.0, %v459
        %v524 = vsub.f32 0.0, %v462
        %v525 = vsub.f32 0.0, %v465
        %v526 = vsub.f32 0.0, %v468
        %v527 = vsub.f32 0.0, %v471
        %v528 = vsub.f32 0.0, %v474
        %v529 = vsub.f32 0.0, %v477
        %v530 = vsub.f32 0.0, %v480
        %v531 = vsub.f32 0.0, %v483
        %v532 = vsub.f32 0.0, %v486
        %v533 = vmin.f32 %v517, 0.0
        %v534 = vmin.f32 %v518, 0.0
        %v535 = vmin.f32 %v519, 0.0
        %v536 = vmin.f32 %v520, 0.0
        %v537 = vmin.f32 %v521, 0.0
        %v538 = vmin.f32 %v522, 0.0
        %v539 = vmin.f32 %v523, 0.0
        %v540 = vmin.f32 %v524, 0.0
        %v541 = vmin.f32 %v525, 0.0
        %v542 = vmin.f32 %v526, 0.0
        %v543 = vmin.f32 %v527, 0.0
        %v544 = vmin.f32 %v528, 0.0
        %v545 = vmin.f32 %v529, 0.0
        %v546 = vmin.f32 %v530, 0.0
        %v547 = vmin.f32 %v531, 0.0
        %v548 = vmin.f32 %v532, 0.0
        %v549 = vand.u32 2147483647, %v517
        %v550 = vand.u32 2147483647, %v518
        %v551 = vand.u32 2147483647, %v519
        %v552 = vand.u32 2147483647, %v520
        %v553 = vand.u32 2147483647, %v521
        %v554 = vand.u32 2147483647, %v522
        %v555 = vand.u32 2147483647, %v523
        %v556 = vand.u32 2147483647, %v524
        %v557 = vand.u32 2147483647, %v525
        %v558 = vand.u32 2147483647, %v526
        %v559 = vand.u32 2147483647, %v527
        %v560 = vand.u32 2147483647, %v528
        %v561 = vand.u32 2147483647, %v529
        %v562 = vand.u32 2147483647, %v530
        %v563 = vand.u32 2147483647, %v531
        %v564 = vand.u32 2147483647, %v532
        %v565 = vsub.f32 0.0, %v549
        %v566 = vsub.f32 0.0, %v550
        %v567 = vsub.f32 0.0, %v551
        %v568 = vsub.f32 0.0, %v552
        %v569 = vsub.f32 0.0, %v553
        %v570 = vsub.f32 0.0, %v554
        %v571 = vsub.f32 0.0, %v555
        %v572 = vsub.f32 0.0, %v556
        %v573 = vsub.f32 0.0, %v557
        %v574 = vsub.f32 0.0, %v558
        %v575 = vsub.f32 0.0, %v559
        %v576 = vsub.f32 0.0, %v560
        %v577 = vsub.f32 0.0, %v561
        %v578 = vsub.f32 0.0, %v562
        %v579 = vsub.f32 0.0, %v563
        %v580 = vsub.f32 0.0, %v564
        %v581 = vmul.f32 %v565, 1.442695
        %v582 = vpow.pop %v581
        %v583 = vmul.f32 %v566, 1.442695
        %v584 = vpow.pop %v583
        %v585 = vmul.f32 %v567, 1.442695
        %v586 = vpow.pop %v585
        %v587 = vmul.f32 %v568, 1.442695
        %v588 = vpow.pop %v587
        %v589 = vmul.f32 %v569, 1.442695
        %v590 = vpow.pop %v589
        %v591 = vmul.f32 %v570, 1.442695
        %v592 = vpow.pop %v591
        %v593 = vmul.f32 %v571, 1.442695
        %v594 = vpow.pop %v593
        %v595 = vmul.f32 %v572, 1.442695
        %v596 = vpow.pop %v595
        %v597 = vmul.f32 %v573, 1.442695
        %v598 = vpow.pop %v597
        %v599 = vmul.f32 %v574, 1.442695
        %v600 = vpow.pop %v599
        %v601 = vmul.f32 %v575, 1.442695
        %v602 = vpow.pop %v601
        %v603 = vmul.f32 %v576, 1.442695
        %v604 = vpow.pop %v603
        %v605 = vmul.f32 %v577, 1.442695
        %v606 = vpow.pop %v605
        %v607 = vmul.f32 %v578, 1.442695
        %v608 = vpow.pop %v607
        %v609 = vmul.f32 %v579, 1.442695
        %v610 = vpow.pop %v609
        %v611 = vmul.f32 %v580, 1.442695
        %v612 = vpow.pop %v611
        %v613 = vadd.f32 %v582, 1.0
        %v614 = vlog2.pop %v613
        %v615 = vmul.f32 %v614, 0.6931472
        %v616 = vmul.f32 -0.5, %v582
        %v617 = vadd.f32 %v616, 1.0
        %v618 = vmul.f32 %v617, %v582
        %v619 = vand.u32 2147483647, %v582
        %vm620 = vcmp.lt.f32.partialorder %v619, 0.0004427343
        %v621 = vsel %vm620, %v618, %v615
        %v622 = vadd.f32 %v584, 1.0
        %v623 = vlog2.pop %v622
        %v624 = vmul.f32 %v623, 0.6931472
        %v625 = vmul.f32 -0.5, %v584
        %v626 = vadd.f32 %v625, 1.0
        %v627 = vmul.f32 %v626, %v584
        %v628 = vand.u32 2147483647, %v584
        %vm629 = vcmp.lt.f32.partialorder %v628, 0.0004427343
        %v630 = vsel %vm629, %v627, %v624
        %v631 = vadd.f32 %v586, 1.0
        %v632 = vlog2.pop %v631
        %v633 = vmul.f32 %v632, 0.6931472
        %v634 = vmul.f32 -0.5, %v586
        %v635 = vadd.f32 %v634, 1.0
        %v636 = vmul.f32 %v635, %v586
        %v637 = vand.u32 2147483647, %v586
        %vm638 = vcmp.lt.f32.partialorder %v637, 0.0004427343
        %v639 = vsel %vm638, %v636, %v633
        %v640 = vadd.f32 %v588, 1.0
        %v641 = vlog2.pop %v640
        %v642 = vmul.f32 %v641, 0.6931472
        %v643 = vmul.f32 -0.5, %v588
        %v644 = vadd.f32 %v643, 1.0
        %v645 = vmul.f32 %v644, %v588
        %v646 = vand.u32 2147483647, %v588
        %vm647 = vcmp.lt.f32.partialorder %v646, 0.0004427343
        %v648 = vsel %vm647, %v645, %v642
        %v649 = vadd.f32 %v590, 1.0
        %v650 = vlog2.pop %v649
        %v651 = vmul.f32 %v650, 0.6931472
        %v652 = vmul.f32 -0.5, %v590
        %v653 = vadd.f32 %v652, 1.0
        %v654 = vmul.f32 %v653, %v590
        %v655 = vand.u32 2147483647, %v590
        %vm656 = vcmp.lt.f32.partialorder %v655, 0.0004427343
        %v657 = vsel %vm656, %v654, %v651
        %v658 = vadd.f32 %v592, 1.0
        %v659 = vlog2.pop %v658
        %v660 = vmul.f32 %v659, 0.6931472
        %v661 = vmul.f32 -0.5, %v592
        %v662 = vadd.f32 %v661, 1.0
        %v663 = vmul.f32 %v662, %v592
        %v664 = vand.u32 2147483647, %v592
        %vm665 = vcmp.lt.f32.partialorder %v664, 0.0004427343
        %v666 = vsel %vm665, %v663, %v660
        %v667 = vadd.f32 %v594, 1.0
        %v668 = vlog2.pop %v667
        %v669 = vmul.f32 %v668, 0.6931472
        %v670 = vmul.f32 -0.5, %v594
        %v671 = vadd.f32 %v670, 1.0
        %v672 = vmul.f32 %v671, %v594
        %v673 = vand.u32 2147483647, %v594
        %vm674 = vcmp.lt.f32.partialorder %v673, 0.0004427343
        %v675 = vsel %vm674, %v672, %v669
        %v676 = vadd.f32 %v596, 1.0
        %v677 = vlog2.pop %v676
        %v678 = vmul.f32 %v677, 0.6931472
        %v679 = vmul.f32 -0.5, %v596
        %v680 = vadd.f32 %v679, 1.0
        %v681 = vmul.f32 %v680, %v596
        %v682 = vand.u32 2147483647, %v596
        %vm683 = vcmp.lt.f32.partialorder %v682, 0.0004427343
        %v684 = vsel %vm683, %v681, %v678
        %v685 = vadd.f32 %v598, 1.0
        %v686 = vlog2.pop %v685
        %v687 = vmul.f32 %v686, 0.6931472
        %v688 = vmul.f32 -0.5, %v598
        %v689 = vadd.f32 %v688, 1.0
        %v690 = vmul.f32 %v689, %v598
        %v691 = vand.u32 2147483647, %v598
        %vm692 = vcmp.lt.f32.partialorder %v691, 0.0004427343
        %v693 = vsel %vm692, %v690, %v687
        %v694 = vadd.f32 %v600, 1.0
        %v695 = vlog2.pop %v694
        %v696 = vmul.f32 %v695, 0.6931472
        %v697 = vmul.f32 -0.5, %v600
        %v698 = vadd.f32 %v697, 1.0
        %v699 = vmul.f32 %v698, %v600
        %v700 = vand.u32 2147483647, %v600
        %vm701 = vcmp.lt.f32.partialorder %v700, 0.0004427343
        %v702 = vsel %vm701, %v699, %v696
        %v703 = vadd.f32 %v602, 1.0
        %v704 = vlog2.pop %v703
        %v705 = vmul.f32 %v704, 0.6931472
        %v706 = vmul.f32 -0.5, %v602
        %v707 = vadd.f32 %v706, 1.0
        %v708 = vmul.f32 %v707, %v602
        %v709 = vand.u32 2147483647, %v602
        %vm710 = vcmp.lt.f32.partialorder %v709, 0.0004427343
        %v711 = vsel %vm710, %v708, %v705
        %v712 = vadd.f32 %v604, 1.0
        %v713 = vlog2.pop %v712
        %v714 = vmul.f32 %v713, 0.6931472
        %v715 = vmul.f32 -0.5, %v604
        %v716 = vadd.f32 %v715, 1.0
        %v717 = vmul.f32 %v716, %v604
        %v718 = vand.u32 2147483647, %v604
        %vm719 = vcmp.lt.f32.partialorder %v718, 0.0004427343
        %v720 = vsel %vm719, %v717, %v714
        %v721 = vadd.f32 %v606, 1.0
        %v722 = vlog2.pop %v721
        %v723 = vmul.f32 %v722, 0.6931472
        %v724 = vmul.f32 -0.5, %v606
        %v725 = vadd.f32 %v724, 1.0
        %v726 = vmul.f32 %v725, %v606
        %v727 = vand.u32 2147483647, %v606
        %vm728 = vcmp.lt.f32.partialorder %v727, 0.0004427343
        %v729 = vsel %vm728, %v726, %v723
        %v730 = vadd.f32 %v608, 1.0
        %v731 = vlog2.pop %v730
        %v732 = vmul.f32 %v731, 0.6931472
        %v733 = vmul.f32 -0.5, %v608
        %v734 = vadd.f32 %v733, 1.0
        %v735 = vmul.f32 %v734, %v608
        %v736 = vand.u32 2147483647, %v608
        %vm737 = vcmp.lt.f32.partialorder %v736, 0.0004427343
        %v738 = vsel %vm737, %v735, %v732
        %v739 = vadd.f32 %v610, 1.0
        %v740 = vlog2.pop %v739
        %v741 = vmul.f32 %v740, 0.6931472
        %v742 = vmul.f32 -0.5, %v610
        %v743 = vadd.f32 %v742, 1.0
        %v744 = vmul.f32 %v743, %v610
        %v745 = vand.u32 2147483647, %v610
        %vm746 = vcmp.lt.f32.partialorder %v745, 0.0004427343
        %v747 = vsel %vm746, %v744, %v741
        %v748 = vadd.f32 %v612, 1.0
        %v749 = vlog2.pop %v748
        %v750 = vmul.f32 %v749, 0.6931472
        %v751 = vmul.f32 -0.5, %v612
        %v752 = vadd.f32 %v751, 1.0
        %v753 = vmul.f32 %v752, %v612
        %v754 = vand.u32 2147483647, %v612
        %vm755 = vcmp.lt.f32.partialorder %v754, 0.0004427343
        %v756 = vsel %vm755, %v753, %v750
        %v757 = vsub.f32 %v533, %v621
        %v758 = vsub.f32 %v534, %v630
        %v759 = vsub.f32 %v535, %v639
        %v760 = vsub.f32 %v536, %v648
        %v761 = vsub.f32 %v537, %v657
        %v762 = vsub.f32 %v538, %v666
        %v763 = vsub.f32 %v539, %v675
        %v764 = vsub.f32 %v540, %v684
        %v765 = vsub.f32 %v541, %v693
        %v766 = vsub.f32 %v542, %v702
        %v767 = vsub.f32 %v543, %v711
        %v768 = vsub.f32 %v544, %v720
        %v769 = vsub.f32 %v545, %v729
        %v770 = vsub.f32 %v546, %v738
        %v771 = vsub.f32 %v547, %v747
        %v772 = vsub.f32 %v548, %v756
        %v789 = vlaneseq
        %v790 = vand.u32 %v789, 127
        %v791 = vlaneseq
        %v792 = vshrl.u32 %v791, 7
        %v793 = vsub.s32 %v790, %v792
        %v794 = vrot.slane %v757, %v793
        %v795 = vlaneseq
        %v796 = vshrl.u32 %v795, 7
        %v797 = vsub.s32 %v790, %v796
        %v798 = vrot.slane %v758, %v797
        %v799 = vlaneseq
        %v800 = vshrl.u32 %v799, 7
        %v801 = vsub.s32 %v790, %v800
        %v802 = vrot.slane %v759, %v801
        %v803 = vlaneseq
        %v804 = vshrl.u32 %v803, 7
        %v805 = vsub.s32 %v790, %v804
        %v806 = vrot.slane %v760, %v805
        %v807 = vlaneseq
        %v808 = vshrl.u32 %v807, 7
        %v809 = vsub.s32 %v790, %v808
        %v810 = vrot.slane %v761, %v809
        %v811 = vlaneseq
        %v812 = vshrl.u32 %v811, 7
        %v813 = vsub.s32 %v790, %v812
        %v814 = vrot.slane %v762, %v813
        %v815 = vlaneseq
        %v816 = vshrl.u32 %v815, 7
        %v817 = vsub.s32 %v790, %v816
        %v818 = vrot.slane %v763, %v817
        %v819 = vlaneseq
        %v820 = vshrl.u32 %v819, 7
        %v821 = vsub.s32 %v790, %v820
        %v822 = vrot.slane %v764, %v821
        %v823 = vlaneseq
        %v824 = vshrl.u32 %v823, 7
        %v825 = vsub.s32 %v790, %v824
        %v826 = vrot.slane %v765, %v825
        %v827 = vlaneseq
        %v828 = vshrl.u32 %v827, 7
        %v829 = vsub.s32 %v790, %v828
        %v830 = vrot.slane %v766, %v829
        %v831 = vlaneseq
        %v832 = vshrl.u32 %v831, 7
        %v833 = vsub.s32 %v790, %v832
        %v834 = vrot.slane %v767, %v833
        %v835 = vlaneseq
        %v836 = vshrl.u32 %v835, 7
        %v837 = vsub.s32 %v790, %v836
        %v838 = vrot.slane %v768, %v837
        %v839 = vlaneseq
        %v840 = vshrl.u32 %v839, 7
        %v841 = vsub.s32 %v790, %v840
        %v842 = vrot.slane %v769, %v841
        %v843 = vlaneseq
        %v844 = vshrl.u32 %v843, 7
        %v845 = vsub.s32 %v790, %v844
        %v846 = vrot.slane %v770, %v845
        %v847 = vlaneseq
        %v848 = vshrl.u32 %v847, 7
        %v849 = vsub.s32 %v790, %v848
        %v850 = vrot.slane %v771, %v849
        %v851 = vlaneseq
        %v852 = vshrl.u32 %v851, 7
        %v853 = vsub.s32 %v790, %v852
        %v854 = vrot.slane %v772, %v853
        %vm855 = vcmask 1041409
        %v856 = vsel %vm855, %v798, %v794
        %vm857 = vcmask 1042434
        %v858 = vsel %vm857, %v802, %v856
        %vm859 = vcmask 1043459
        %v860 = vsel %vm859, %v806, %v858
        %vm861 = vcmask 1044484
        %v862 = vsel %vm861, %v810, %v860
        %vm863 = vcmask 1045509
        %v864 = vsel %vm863, %v814, %v862
        %vm865 = vcmask 1046534
        %v866 = vsel %vm865, %v818, %v864
        %vm867 = vcmask 1047559
        %v868 = vsel %vm867, %v822, %v866
        %v869 = vsel %vm855, %v830, %v826
        %v870 = vsel %vm857, %v834, %v869
        %v871 = vsel %vm859, %v838, %v870
        %v872 = vsel %vm861, %v842, %v871
        %v873 = vsel %vm863, %v846, %v872
        %v874 = vsel %vm865, %v850, %v873
        %v875 = vsel %vm867, %v854, %v874
        %vm878 = vcmask 64512
        %v879 = vsel %vm878, %v868, 0.0
        %880 = vadd.xlane.f32.xlu0 %v879
        %v881 = vpop.xlane.xlu0 %880
        %v882 = vsel %vm878, %v875, 0.0
        %883 = vadd.xlane.f32.xlu0 %v882
        %v884 = vpop.xlane.xlu0 %883
        %v885 = vadd.f32 %v515, %v881
        %v886 = vadd.f32 %v516, %v884
        %vm887 = vcmask 7168
        %v888 = vsel %vm887, %v885, 0.0
        %v889 = vsel %vm887, %v886, 0.0
        %v890 = vadd.f32 %v888, %v889
        %891 = vadd.xlane.f32.xlu0 %v890
        %v892 = vpop.xlane.xlu0 %891
        %v893 = vrot.slane %v892, 4
        %v894 = vadd.f32 %v892, %v893
        %v895 = vrot.slane %v894, 2
        %v896 = vadd.f32 %v894, %v895
        %v897 = vrot.slane %v896, 1
        %v898 = vadd.f32 %v896, %v897
        %s899 = vtos %v898
        %v900 = vstv %s899
        %901 = vst [vmem:[%s195] sm:$0x1] %v900
        %s902 = sand.u32 %s103, 1
        %s903 = scalar_lea.sflag [#allocation3], %s902
        %s904 = sand.u32 %s103, 1
        %s905 = scalar_lea.vmem [#allocation2], %s904
        // Predicated region
        $region33: #{tpu_custom_call.1} parent=31 // pred_check
          %p906 = pneg %p113
        $region34: #{tpu_custom_call.1} parent=31 // pred_check_branch
          %908 = sbr.rel (%p906) target = $region36
        $region35: #{tpu_custom_call.1} parent=31 // pred_region
          %s910 = ssub.s32 16, 16
          %911 = vsyncadd %s903, %s910
          %s912 = smul.addr %s17, 16
          %s913 = scalar_lea.hbm %s3, %s912
          %s915 = sshll.u32 %s905, 4
          %s916 = int_to_ptr.vmem [resolvable:$true] %s915
          %918 = dma.vmem_to_hbm [thread:$0]  %s916, 16, %s913, %s903
        $region36: #{tpu_custom_call.1} parent=31 // pred_fallthru
          _
      $region32: #{tpu_custom_call.1} parent=5 // pred_fallthru
        _
      %p919 = scmp.le.s32.totalorder 2, %s12
      // Predicated region
      $region37: #{tpu_custom_call.1} parent=5 // pred_check
        %p920 = pneg %p919
      $region38: #{tpu_custom_call.1} parent=5 // pred_check_branch
        %922 = sbr.rel (%p920) target = $region40
      $region39: #{tpu_custom_call.1} parent=5 // pred_region
        %s923 = ssub.s32 %s12, 2
        // Predicated region
        $region41: #{tpu_custom_call.1} parent=39 // pred_check
          %p924 = pneg %p119
        $region42: #{tpu_custom_call.1} parent=39 // pred_check_branch
          %926 = sbr.rel (%p924) target = $region44
        $region43: #{tpu_custom_call.1} parent=39 // pred_region
          %s927 = sand.u32 %s104, 1
          %s928 = scalar_lea.sflag [#allocation3], %s927
          %s929 = sand.u32 %s104, 1
          %s930 = scalar_lea.vmem [#allocation2], %s929
          %931 = dma.done %s928, 16
        $region44: #{tpu_custom_call.1} parent=39 // pred_fallthru
          _
      $region40: #{tpu_custom_call.1} parent=5 // pred_fallthru
        _
    $region6: #{tpu_custom_call.1} parent=1 // loop_footer
      %s16 = sadd.s32 1, %s12
    $region7: #{tpu_custom_call.1} parent=1 // loop_footer_branch
      %11 = sbr.rel target = $region3
    $region8: #{tpu_custom_call.1} parent=1 // loop_exit
      _
    %932 = vsyncpa [#allocation3], 1
    %s933 = scalar_lea.sflag [#allocation3], 1
    %934 = vsyncpa %s933, 1

</llo_original>
